<compile_context>
chip_gen: v5e
topology: v5e:2x2
jax: 0.10.0
libtpu: 0.0.40
codegen_flags: <defaults>
</compile_context>

<pallas_src>
from typing import NamedTuple

import jax
import jax.numpy as jnp
from jax.experimental import pallas as pl
from jax.experimental.pallas import tpu as pltpu

LANE = 128


def _round_up(n, m):
    return ((n + m - 1) // m) * m


def _cdiv(a, b):
    return (a + b - 1) // b


def _vmem_budget_bytes():
    """~75% of this generation's physical VMEM (v5e/v6e: 128 MiB, v7x: 64 MiB).

    Falls back to a conservative 64 MiB capacity if hardware info is
    unavailable (e.g. interpret mode / CPU).
    """
    cap = 64 * 1024 * 1024
    try:
        info = pltpu.get_tpu_info()
        cap = int(getattr(info, "vmem_capacity_bytes", cap)) or cap
    except Exception:
        pass
    return (3 * cap) // 4


def _resident_spec(block_shape):
    """BlockSpec for an operand kept VMEM-resident across all grid steps.

    Constant index_map -> no revisiting DMA; single-buffered (pl.Buffered(1))
    so it does not pay the default double-buffer VMEM cost.  Falls back to a
    plain BlockSpec on JAX versions without pipeline_mode support.
    """
    index_map = lambda i: (0,) * len(block_shape)
    try:
        return pl.BlockSpec(block_shape, index_map, pipeline_mode=pl.Buffered(1))
    except (TypeError, AttributeError):
        return pl.BlockSpec(block_shape, index_map)


def mlp_kernel(x_ref, w1_ref, b1_ref, w2_ref, b2_ref, o_ref):
    # fc1: [tile_b, d_in_p] @ [d_in_p, h_p] on the MXU, f32 accumulation.
    h = jnp.dot(x_ref[...], w1_ref[...], preferred_element_type=jnp.float32)
    # Fused epilogue: bias + ReLU in f32, immediately downcast to the fc2 MXU
    # input dtype so only a single [tile_b, h_p] temp stays live.
    h = jnp.maximum(h + b1_ref[...], 0.0).astype(w2_ref.dtype)
    # fc2: [tile_b, h_p] @ [h_p, d_out_p], f32 accumulation.
    out = jnp.dot(h, w2_ref[...], preferred_element_type=jnp.float32)
    o_ref[...] = (out + b2_ref[...]).astype(o_ref.dtype)


class MLPParams(NamedTuple):
    w1: jax.Array   # [d_in_p, h_p]   compute dtype, lane-padded
    b1: jax.Array   # [1, h_p]        f32
    w2: jax.Array   # [h_p, d_out_p]  compute dtype
    b2: jax.Array   # [1, d_out_p]    f32
    d_in: int
    d_out: int


def prepare_mlp_params(w1, b1, w2, b2, compute_dtype=jnp.bfloat16):
    """Pad feature dims to 128 multiples and cast to the MXU compute dtype.

    Hoisted out of the per-call path: run once per set of weights and reuse
    across forwards.  w1 == fc1.weight.T, w2 == fc2.weight.T.  Padded hidden
    columns get zero weight AND zero bias, so relu(0)=0 and they contribute
    nothing to fc2 -> numerics are unchanged.
    """
    d_in, h = w1.shape
    d_out = w2.shape[1]
    d_in_p, h_p, d_out_p = (_round_up(d, LANE) for d in (d_in, h, d_out))
    cd = compute_dtype
    w1_p = jnp.zeros((d_in_p, h_p), cd).at[:d_in, :h].set(w1.astype(cd))
    b1_p = jnp.zeros((1, h_p), jnp.float32).at[:, :h].set(
        jnp.reshape(b1, (1, h)).astype(jnp.float32))
    w2_p = jnp.zeros((h_p, d_out_p), cd).at[:h, :d_out].set(w2.astype(cd))
    b2_p = jnp.zeros((1, d_out_p), jnp.float32).at[:, :d_out].set(
        jnp.reshape(b2, (1, d_out)).astype(jnp.float32))
    return MLPParams(w1_p, b1_p, w2_p, b2_p, int(d_in), int(d_out))


def _choose_tile_b(B, per_row_bytes, avail_bytes):
    # Tiny batches: one full-extent block (exact; MXU handles M < 128 fine,
    # avoids paying up to 16x DMA/matmul on padded rows).
    if B <= 128:
        return B
    # Large batches: multiples of 128, as big as the VMEM budget allows.
    by_vmem = max(LANE, (avail_bytes // max(per_row_bytes, 1)) // LANE * LANE)
    cap = 1024
    if B >= 256:
        # Keep >= 2 grid steps so dimension_semantics=("parallel",) actually
        # shards the batch across v7x's two TensorCores (no-op on v5e/v6e).
        cap = min(cap, max(LANE, _round_up(_cdiv(B, 2), LANE)))
    return int(min(by_vmem, cap, _round_up(B, LANE)))


def mlp_forward(x, params: MLPParams, *, out_dtype=jnp.float32, tile_b=None):
    """relu(x @ w1 + b1) @ w2 + b2.  x: [B, d_in] -> [B, d_out] in out_dtype."""
    B, d_in = x.shape
    assert d_in == params.d_in, (d_in, params.d_in)
    w1_p, b1_p, w2_p, b2_p = params.w1, params.b1, params.w2, params.b2
    d_in_p, h_p = w1_p.shape
    d_out_p = w2_p.shape[1]
    cd = w1_p.dtype
    cd_bytes = jnp.dtype(cd).itemsize
    out_bytes = jnp.dtype(out_dtype).itemsize

    # Per-generation VMEM budgeting: single-buffered resident weights plus the
    # per-row tile cost (double-buffered x/out tiles + hidden intermediates).
    budget = _vmem_budget_bytes()
    resident_bytes = ((d_in_p * h_p + h_p * d_out_p) * cd_bytes
                      + (h_p + d_out_p) * 4)
    per_row_bytes = (2 * d_in_p * cd_bytes          # x tile, double-buffered
                     + 2 * d_out_p * out_bytes      # out tile, double-buffered
                     + h_p * (4 + cd_bytes))        # f32 hidden + bf16 temp
    # TODO(synk): if resident_bytes > 0.6 * budget, switch to a (batch, K) grid
    #             with a pl.when-initialized f32 accumulator scratch.
    avail = max(budget - resident_bytes - (2 << 20), per_row_bytes)
    if tile_b is None:
        tile_b = _choose_tile_b(B, per_row_bytes, avail)
    tile_b = int(max(1, min(tile_b, _round_up(B, LANE))))

    # Feature-dim pad / compute-dtype cast of x only.  The batch dim is NOT
    # padded: the grid uses a ragged last block (rows are independent and
    # out-of-bounds writes are dropped), so no extra HBM pass over x.
    if d_in_p == d_in and x.dtype == cd:
        x_p = x
    else:
        x_p = jnp.zeros((B, d_in_p), cd).at[:, :d_in].set(x.astype(cd))

    grid = (_cdiv(B, tile_b),)

    vmem_est = resident_bytes + tile_b * per_row_bytes
    vmem_limit = max(int(1.25 * vmem_est), 16 * 1024 * 1024)
    vmem_limit = min(vmem_limit, budget)
    vmem_limit = int(max(vmem_limit, vmem_est))     # never declare < real use

    out_p = pl.pallas_call(
        mlp_kernel,
        out_shape=jax.ShapeDtypeStruct((B, d_out_p), out_dtype),
        grid=grid,
        in_specs=[
            pl.BlockSpec((tile_b, d_in_p), lambda i: (i, 0)),   # x: tiled over B
            _resident_spec((d_in_p, h_p)),                      # w1: resident
            _resident_spec((1, h_p)),                           # b1: resident
            _resident_spec((h_p, d_out_p)),                     # w2: resident
            _resident_spec((1, d_out_p)),                       # b2: resident
        ],
        out_specs=pl.BlockSpec((tile_b, d_out_p), lambda i: (i, 0)),
        compiler_params=pltpu.CompilerParams(
            dimension_semantics=("parallel",),
            vmem_limit_bytes=vmem_limit,
        ),
    )(x_p, w1_p, b1_p, w2_p, b2_p)

    # Lane-dense stores inside the kernel; slice feature padding away outside.
    return out_p[:, :params.d_out] if d_out_p != params.d_out else out_p


def mlp_reference(x, w1, b1, w2, b2, compute_dtype=jnp.bfloat16):
    """Pure-JAX reference with the kernel's numerics (bf16 inputs, f32 accum)."""
    cd = compute_dtype
    h = jnp.dot(x.astype(cd), w1.astype(cd), preferred_element_type=jnp.float32)
    h = jnp.maximum(h + jnp.reshape(b1, (1, -1)).astype(jnp.float32), 0.0).astype(cd)
    out = jnp.dot(h, w2.astype(cd), preferred_element_type=jnp.float32)
    return out + jnp.reshape(b2, (1, -1)).astype(jnp.float32)


if __name__ == "__main__":
    batch = 8
    input_dim = 32
    hidden_dim = 64
    output_dim = 16

    key = jax.random.PRNGKey(0)
    x = jax.random.normal(key, (batch, input_dim), dtype=jnp.float32)

    # init='ones' per the PyTorch module default (exactly representable in bf16).
    w1 = jnp.ones((input_dim, hidden_dim), jnp.float32)    # = fc1.weight.T
    b1 = jnp.ones((hidden_dim,), jnp.float32)               # = fc1.bias
    w2 = jnp.ones((hidden_dim, output_dim), jnp.float32)    # = fc2.weight.T
    b2 = jnp.ones((output_dim,), jnp.float32)                # = fc2.bias

    # Hoisted pad/cast: done once, reused across forwards.
    params = prepare_mlp_params(w1, b1, w2, b2)

    out = mlp_forward(x, params)
    out = jax.block_until_ready(out)
    assert out.shape == (batch, output_dim)

    # Tight check vs a reference with matched numerics (bf16 MXU inputs,
    # f32 accumulation, bf16 hidden downcast).
    ref = mlp_reference(x, w1, b1, w2, b2)
    assert jnp.allclose(out, ref, rtol=1e-2, atol=1e-2), \
        "mismatch vs matched-precision reference"

    # Loose check vs the full-f32 module semantics (bf16 rounding tolerance).
    ref_f32 = jnp.maximum(x @ w1 + b1[None, :], 0.0) @ w2 + b2[None, :]
    scale = jnp.max(jnp.abs(ref_f32)) + 1.0
    assert jnp.max(jnp.abs(out - ref_f32)) <= 2e-2 * scale, \
        "mismatch vs f32 reference"

    print("KERNEL_OK")
</pallas_src>

<mosaic_0001>
module attributes {stable_mosaic.version = 11 : i64} {
  func.func @mlp_kernel(%arg0: i32, %arg1: memref<8x128xbf16, #tpu.memory_space<vmem>>, %arg2: memref<128x128xbf16, #tpu.memory_space<vmem>>, %arg3: memref<1x128xf32, #tpu.memory_space<vmem>>, %arg4: memref<128x128xbf16, #tpu.memory_space<vmem>>, %arg5: memref<1x128xf32, #tpu.memory_space<vmem>>, %arg6: memref<8x128xf32, #tpu.memory_space<vmem>>) attributes {dimension_semantics = [#tpu.dimension_semantics<parallel>], iteration_bounds = array<i64: 1>, scalar_prefetch = 0 : i64, scratch_operands = 0 : i64, tpu.core_type = #tpu.core_type<tc>, window_params = [{transform_indices = @transform_0, window_bounds = array<i64: 8, 128>}, {pipeline_mode = #tpu.pipeline_mode<synchronous>, transform_indices = @transform_1, window_bounds = array<i64: 128, 128>}, {pipeline_mode = #tpu.pipeline_mode<synchronous>, transform_indices = @transform_2, window_bounds = array<i64: 1, 128>}, {pipeline_mode = #tpu.pipeline_mode<synchronous>, transform_indices = @transform_3, window_bounds = array<i64: 128, 128>}, {pipeline_mode = #tpu.pipeline_mode<synchronous>, transform_indices = @transform_4, window_bounds = array<i64: 1, 128>}, {transform_indices = @transform_5, window_bounds = array<i64: 8, 128>}]} {
    %c0 = arith.constant 0 : index
    %c0_0 = arith.constant 0 : index
    %0 = vector.load %arg1[%c0, %c0_0] : memref<8x128xbf16, #tpu.memory_space<vmem>>, vector<8x128xbf16>
    %c0_1 = arith.constant 0 : index
    %c0_2 = arith.constant 0 : index
    %1 = vector.load %arg2[%c0_1, %c0_2] : memref<128x128xbf16, #tpu.memory_space<vmem>>, vector<128x128xbf16>
    %cst = arith.constant dense<0.000000e+00> : vector<8x128xf32>
    %2 = tpu.matmul %0, %1, %cst {dimension_numbers = #tpu.dot_dimension_numbers<[1], [0], [0], [1], [0, 0, 1, 1], [], []>} : vector<8x128xbf16>, vector<128x128xbf16>, vector<8x128xf32> -> vector<8x128xf32>
    %c0_3 = arith.constant 0 : index
    %c0_4 = arith.constant 0 : index
    %3 = vector.load %arg3[%c0_3, %c0_4] : memref<1x128xf32, #tpu.memory_space<vmem>>, vector<1x128xf32>
    %4 = vector.broadcast %3 : vector<1x128xf32> to vector<8x128xf32>
    %5 = arith.addf %2, %4 : vector<8x128xf32>
    %cst_5 = arith.constant 0.000000e+00 : f32
    %6 = vector.broadcast %cst_5 : f32 to vector<8x128xf32>
    %7 = arith.maximumf %5, %6 : vector<8x128xf32>
    %8 = arith.truncf %7 : vector<8x128xf32> to vector<8x128xbf16>
    %c0_6 = arith.constant 0 : index
    %c0_7 = arith.constant 0 : index
    %9 = vector.load %arg4[%c0_6, %c0_7] : memref<128x128xbf16, #tpu.memory_space<vmem>>, vector<128x128xbf16>
    %cst_8 = arith.constant dense<0.000000e+00> : vector<8x128xf32>
    %10 = tpu.matmul %8, %9, %cst_8 {dimension_numbers = #tpu.dot_dimension_numbers<[1], [0], [0], [1], [0, 0, 1, 1], [], []>} : vector<8x128xbf16>, vector<128x128xbf16>, vector<8x128xf32> -> vector<8x128xf32>
    %c0_9 = arith.constant 0 : index
    %c0_10 = arith.constant 0 : index
    %11 = vector.load %arg5[%c0_9, %c0_10] : memref<1x128xf32, #tpu.memory_space<vmem>>, vector<1x128xf32>
    %12 = vector.broadcast %11 : vector<1x128xf32> to vector<8x128xf32>
    %13 = arith.addf %10, %12 : vector<8x128xf32>
    %c0_11 = arith.constant 0 : index
    %c0_12 = arith.constant 0 : index
    %14 = vector.load %arg6[%c0_11, %c0_12] : memref<8x128xf32, #tpu.memory_space<vmem>>, vector<8x128xf32>
    tpu.vector_store %arg6[%c0_11, %c0_12], %13 {strides = array<i32>} : memref<8x128xf32, #tpu.memory_space<vmem>>, vector<8x128xf32>,
    return
  }
  func.func @transform_0(%arg0: i32) -> (i32, i32) {
    %c0_i32 = arith.constant 0 : i32
    %c0_i32_0 = arith.constant 0 : i32
    return %arg0, %c0_i32 : i32, i32
  }
  func.func @transform_1(%arg0: i32) -> (i32, i32) {
    %c0_i32 = arith.constant 0 : i32
    %c0_i32_0 = arith.constant 0 : i32
    %c0_i32_1 = arith.constant 0 : i32
    return %c0_i32, %c0_i32_0 : i32, i32
  }
  func.func @transform_2(%arg0: i32) -> (i32, i32) {
    %c0_i32 = arith.constant 0 : i32
    %c0_i32_0 = arith.constant 0 : i32
    %c0_i32_1 = arith.constant 0 : i32
    return %c0_i32, %c0_i32_0 : i32, i32
  }
  func.func @transform_3(%arg0: i32) -> (i32, i32) {
    %c0_i32 = arith.constant 0 : i32
    %c0_i32_0 = arith.constant 0 : i32
    %c0_i32_1 = arith.constant 0 : i32
    return %c0_i32, %c0_i32_0 : i32, i32
  }
  func.func @transform_4(%arg0: i32) -> (i32, i32) {
    %c0_i32 = arith.constant 0 : i32
    %c0_i32_0 = arith.constant 0 : i32
    %c0_i32_1 = arith.constant 0 : i32
    return %c0_i32, %c0_i32_0 : i32, i32
  }
  func.func @transform_5(%arg0: i32) -> (i32, i32) {
    %c0_i32 = arith.constant 0 : i32
    %c0_i32_0 = arith.constant 0 : i32
    return %arg0, %c0_i32 : i32, i32
  }
}

</mosaic_0001>

<llo_original>
// kernel: tpu_custom_call.1
$region0: #{tpu_custom_call.1}
  #allocation0 [shape = 'u32[]', space=smem, size = 0x4, offset = 0x4, fixed_abs, tag = 'smem constant byte address 0x4 - core index']
  #allocation1 [shape = 'u32[72,128]{1,0:T(1,128)}', space=vmem, size = 0x9000, scoped, tag = 'internal scratch']
  %s0 = inlined_call_operand.hbm [shape: bf16[8,128], index: 0, kind: input, shape index: {}]
  %s1 = inlined_call_operand.hbm [shape: bf16[128,128], index: 1, kind: input, shape index: {}]
  %s2 = inlined_call_operand.vmem [shape: f32[1,128], index: 2, kind: input, shape index: {}]
  %s3 = inlined_call_operand.hbm [shape: bf16[128,128], index: 3, kind: input, shape index: {}]
  %s4 = inlined_call_operand.vmem [shape: f32[1,128], index: 4, kind: input, shape index: {}]
  %s5 = inlined_call_operand.hbm [shape: f32[8,128], index: 5, kind: output, shape index: {}]
  %s6 = sld [smem:[#allocation0]]
  $region42: #{tpu_custom_call.1} parent=0
    _
  %s8 = ssub.s32 1, %s6
  %s9 = scalar_select 0, %s8, %s6
  $region1: #{tpu_custom_call.1} parent=0
    #allocation2 [shape = 'u8[2048]{0}', space=vmem, size = 0x800, scoped, tag = 'input window, operand 0, single buffered']
    #allocation3 [shape = 's32[1]{0}', space=sflag, size = 0x4, scoped, tag = 'scoped memory for tpu_custom_call.1']
    #allocation4 [shape = 's32[1]{0}', space=sflag, size = 0x4, scoped, tag = 'scoped memory for tpu_custom_call.1']
    #allocation5 [shape = 'u8[32768]{0}', space=vmem, size = 0x8000, scoped, tag = 'input window, operand 1, single buffered']
    #allocation6 [shape = 's32[1]{0}', space=sflag, size = 0x4, scoped, tag = 'scoped memory for tpu_custom_call.1']
    #allocation7 [shape = 'u8[32768]{0}', space=vmem, size = 0x8000, scoped, tag = 'input window, operand 3, single buffered']
    #allocation8 [shape = 'u8[4096]{0}', space=vmem, size = 0x1000, scoped, tag = 'output window, operand 0, single buffered']
    %10 = vsyncpa [#allocation3], 0
    %11 = vsyncpa [#allocation6], 0
    %12 = vsyncpa [#allocation4], 0
    // Predicated region
    $region2: #{tpu_custom_call.1} parent=1 // pred_check
      _
    $region3: #{tpu_custom_call.1} parent=1 // pred_check_branch
      %14 = sbr.rel (0) target = $region5
    $region4: #{tpu_custom_call.1} parent=1 // pred_region
      %16 = vsyncadd [#allocation3], 0
      %s18 = sshll.u32 %s0, 4
      %s19 = int_to_ptr.hbm [resolvable:$true] %s18
      %s20 = sshll.u32 [#allocation2], 4
      %s21 = int_to_ptr.vmem [resolvable:$true] %s20
      %23 = dma.hbm_to_vmem [thread:$0]  %s19, 64, %s21, [#allocation3]
    $region5: #{tpu_custom_call.1} parent=1 // pred_fallthru
      _
    // Predicated region
    $region6: #{tpu_custom_call.1} parent=1 // pred_check
      _
    $region7: #{tpu_custom_call.1} parent=1 // pred_check_branch
      %25 = sbr.rel (0) target = $region9
    $region8: #{tpu_custom_call.1} parent=1 // pred_region
      %27 = vsyncadd [#allocation6], 0
      %s28 = sshll.u32 %s1, 4
      %s29 = int_to_ptr.hbm [resolvable:$true] %s28
      %s30 = sshll.u32 [#allocation5], 4
      %s31 = int_to_ptr.vmem [resolvable:$true] %s30
      %36 = dma.hbm_to_vmem [thread:$0]  %s29, 1024, %s31, [#allocation6], 64, 64, 4
    $region9: #{tpu_custom_call.1} parent=1 // pred_fallthru
      _
    // Predicated region
    $region10: #{tpu_custom_call.1} parent=1 // pred_check
      _
    $region11: #{tpu_custom_call.1} parent=1 // pred_check_branch
      %38 = sbr.rel (0) target = $region13
    $region12: #{tpu_custom_call.1} parent=1 // pred_region
      _
    $region13: #{tpu_custom_call.1} parent=1 // pred_fallthru
      _
    // Predicated region
    $region14: #{tpu_custom_call.1} parent=1 // pred_check
      _
    $region15: #{tpu_custom_call.1} parent=1 // pred_check_branch
      %40 = sbr.rel (0) target = $region17
    $region16: #{tpu_custom_call.1} parent=1 // pred_region
      %42 = vsyncadd [#allocation6], 0
      %s43 = sshll.u32 %s3, 4
      %s44 = int_to_ptr.hbm [resolvable:$true] %s43
      %s45 = sshll.u32 [#allocation7], 4
      %s46 = int_to_ptr.vmem [resolvable:$true] %s45
      %51 = dma.hbm_to_vmem [thread:$0]  %s44, 1024, %s46, [#allocation6], 64, 64, 4
    $region17: #{tpu_custom_call.1} parent=1 // pred_fallthru
      _
    // Predicated region
    $region18: #{tpu_custom_call.1} parent=1 // pred_check
      _
    $region19: #{tpu_custom_call.1} parent=1 // pred_check_branch
      %53 = sbr.rel (0) target = $region21
    $region20: #{tpu_custom_call.1} parent=1 // pred_region
      _
    $region21: #{tpu_custom_call.1} parent=1 // pred_fallthru
      _
    // Predicated region
    $region22: #{tpu_custom_call.1} parent=1 // pred_check
      _
    $region23: #{tpu_custom_call.1} parent=1 // pred_check_branch
      %55 = sbr.rel (0) target = $region25
    $region24: #{tpu_custom_call.1} parent=1 // pred_region
      %57 = dma.done [#allocation3], 64
    $region25: #{tpu_custom_call.1} parent=1 // pred_fallthru
      _
    // Predicated region
    $region26: #{tpu_custom_call.1} parent=1 // pred_check
      _
    $region27: #{tpu_custom_call.1} parent=1 // pred_check_branch
      %59 = sbr.rel (0) target = $region29
    $region28: #{tpu_custom_call.1} parent=1 // pred_region
      %61 = dma.done [#allocation6], 1024
    $region29: #{tpu_custom_call.1} parent=1 // pred_fallthru
      _
    // Predicated region
    $region30: #{tpu_custom_call.1} parent=1 // pred_check
      _
    $region31: #{tpu_custom_call.1} parent=1 // pred_check_branch
      %63 = sbr.rel (0) target = $region33
    $region32: #{tpu_custom_call.1} parent=1 // pred_region
      %65 = dma.done [#allocation6], 1024
    $region33: #{tpu_custom_call.1} parent=1 // pred_fallthru
      _
    %v66 = vld [vmem:[#allocation2] sm:$0xf]
    %v67 = vld [vmem:[#allocation5] sm:$0xf]
    %v68 = vld [vmem:[#allocation5 + $0x4] sm:$0xf]
    %v69 = vld [vmem:[#allocation5 + $0x8] sm:$0xf]
    %v70 = vld [vmem:[#allocation5 + $0xc] sm:$0xf]
    %v71 = vld [vmem:[#allocation5 + $0x10] sm:$0xf]
    %v72 = vld [vmem:[#allocation5 + $0x14] sm:$0xf]
    %v73 = vld [vmem:[#allocation5 + $0x18] sm:$0xf]
    %v74 = vld [vmem:[#allocation5 + $0x1c] sm:$0xf]
    %v75 = vld [vmem:[#allocation5 + $0x20] sm:$0xf]
    %v76 = vld [vmem:[#allocation5 + $0x24] sm:$0xf]
    %v77 = vld [vmem:[#allocation5 + $0x28] sm:$0xf]
    %v78 = vld [vmem:[#allocation5 + $0x2c] sm:$0xf]
    %v79 = vld [vmem:[#allocation5 + $0x30] sm:$0xf]
    %v80 = vld [vmem:[#allocation5 + $0x34] sm:$0xf]
    %v81 = vld [vmem:[#allocation5 + $0x38] sm:$0xf]
    %v82 = vld [vmem:[#allocation5 + $0x3c] sm:$0xf]
    %v83 = vld [vmem:[%s2] sm:$0x1]
    %v85 = vperm.slane %v83, 0
    %v103 = vunpack.c.l.b16 %v67
    %v104 = vunpack.c.l.b16 %v68
    %v105 = vunpack.c.l.b16 %v69
    %v106 = vunpack.c.l.b16 %v70
    %v107 = vunpack.c.l.b16 %v71
    %v108 = vunpack.c.l.b16 %v72
    %v109 = vunpack.c.l.b16 %v73
    %v110 = vunpack.c.l.b16 %v74
    %v111 = vunpack.c.l.b16 %v75
    %v112 = vunpack.c.l.b16 %v76
    %v113 = vunpack.c.l.b16 %v77
    %v114 = vunpack.c.l.b16 %v78
    %v115 = vunpack.c.l.b16 %v79
    %v116 = vunpack.c.l.b16 %v80
    %v117 = vunpack.c.l.b16 %v81
    %v118 = vunpack.c.l.b16 %v82
    %v119 = vpack.c.b16 %v104, %v103
    %v120 = vpack.c.b16 %v106, %v105
    %v121 = vpack.c.b16 %v108, %v107
    %v122 = vpack.c.b16 %v110, %v109
    %v123 = vpack.c.b16 %v112, %v111
    %v124 = vpack.c.b16 %v114, %v113
    %v125 = vpack.c.b16 %v116, %v115
    %v126 = vpack.c.b16 %v118, %v117
    %135 = vmatpush.bf16.msra.mxu0 %v126
    %136 = vmatpush.bf16.msra.mxu0 %v125
    %137 = vmatpush.bf16.msra.mxu0 %v124
    %138 = vmatpush.bf16.msra.mxu0 %v123
    %139 = vmatpush.bf16.msra.mxu0 %v122
    %140 = vmatpush.bf16.msra.mxu0 %v121
    %141 = vmatpush.bf16.msra.mxu0 %v120
    %142 = vmatpush.bf16.msra.mxu0 %v119
    %143 = vmatmul.bf16.gmra.mxu0 %v66
    %v144 = vpop.f32.mrf.mxu0
    %v145 = vadd.f32 %v85, %v144
    %v146 = vpop.f32.mrf.mxu0
    %147 = vdwg.mxu0
    %v148 = vmax.f32 %v145, 0.0
    %v149 = vpack.c.bf16 %v148, %v148
    %v150 = vld [vmem:[#allocation7] sm:$0xf]
    %v151 = vld [vmem:[#allocation7 + $0x4] sm:$0xf]
    %v152 = vld [vmem:[#allocation7 + $0x8] sm:$0xf]
    %v153 = vld [vmem:[#allocation7 + $0xc] sm:$0xf]
    %v154 = vld [vmem:[#allocation7 + $0x10] sm:$0xf]
    %v155 = vld [vmem:[#allocation7 + $0x14] sm:$0xf]
    %v156 = vld [vmem:[#allocation7 + $0x18] sm:$0xf]
    %v157 = vld [vmem:[#allocation7 + $0x1c] sm:$0xf]
    %v158 = vld [vmem:[#allocation7 + $0x20] sm:$0xf]
    %v159 = vld [vmem:[#allocation7 + $0x24] sm:$0xf]
    %v160 = vld [vmem:[#allocation7 + $0x28] sm:$0xf]
    %v161 = vld [vmem:[#allocation7 + $0x2c] sm:$0xf]
    %v162 = vld [vmem:[#allocation7 + $0x30] sm:$0xf]
    %v163 = vld [vmem:[#allocation7 + $0x34] sm:$0xf]
    %v164 = vld [vmem:[#allocation7 + $0x38] sm:$0xf]
    %v165 = vld [vmem:[#allocation7 + $0x3c] sm:$0xf]
    %v166 = vld [vmem:[%s4] sm:$0x1]
    %v168 = vperm.slane %v166, 0
    %v186 = vunpack.c.l.b16 %v150
    %v187 = vunpack.c.l.b16 %v151
    %v188 = vunpack.c.l.b16 %v152
    %v189 = vunpack.c.l.b16 %v153
    %v190 = vunpack.c.l.b16 %v154
    %v191 = vunpack.c.l.b16 %v155
    %v192 = vunpack.c.l.b16 %v156
    %v193 = vunpack.c.l.b16 %v157
    %v194 = vunpack.c.l.b16 %v158
    %v195 = vunpack.c.l.b16 %v159
    %v196 = vunpack.c.l.b16 %v160
    %v197 = vunpack.c.l.b16 %v161
    %v198 = vunpack.c.l.b16 %v162
    %v199 = vunpack.c.l.b16 %v163
    %v200 = vunpack.c.l.b16 %v164
    %v201 = vunpack.c.l.b16 %v165
    %v202 = vpack.c.b16 %v187, %v186
    %v203 = vpack.c.b16 %v189, %v188
    %v204 = vpack.c.b16 %v191, %v190
    %v205 = vpack.c.b16 %v193, %v192
    %v206 = vpack.c.b16 %v195, %v194
    %v207 = vpack.c.b16 %v197, %v196
    %v208 = vpack.c.b16 %v199, %v198
    %v209 = vpack.c.b16 %v201, %v200
    %218 = vmatpush.bf16.msra.mxu0 %v209
    %219 = vmatpush.bf16.msra.mxu0 %v208
    %220 = vmatpush.bf16.msra.mxu0 %v207
    %221 = vmatpush.bf16.msra.mxu0 %v206
    %222 = vmatpush.bf16.msra.mxu0 %v205
    %223 = vmatpush.bf16.msra.mxu0 %v204
    %224 = vmatpush.bf16.msra.mxu0 %v203
    %225 = vmatpush.bf16.msra.mxu0 %v202
    %226 = vmatmul.bf16.gmra.mxu0 %v149
    %v227 = vpop.f32.mrf.mxu0
    %v228 = vadd.f32 %v168, %v227
    %v229 = vpop.f32.mrf.mxu0
    %230 = vdwg.mxu0
    %231 = vst [vmem:[#allocation8] sm:$0xff] %v228
    // Predicated region
    $region34: #{tpu_custom_call.1} parent=1 // pred_check
      _
    $region35: #{tpu_custom_call.1} parent=1 // pred_check_branch
      %233 = sbr.rel (0) target = $region37
    $region36: #{tpu_custom_call.1} parent=1 // pred_region
      %235 = vsyncadd [#allocation4], 0
      %s237 = sshll.u32 [#allocation8], 4
      %s238 = int_to_ptr.vmem [resolvable:$true] %s237
      %s239 = sshll.u32 %s5, 4
      %s240 = int_to_ptr.hbm [resolvable:$true] %s239
      %242 = dma.vmem_to_hbm [thread:$0]  %s238, 128, %s240, [#allocation4]
    $region37: #{tpu_custom_call.1} parent=1 // pred_fallthru
      _
    // Predicated region
    $region38: #{tpu_custom_call.1} parent=1 // pred_check
      _
    $region39: #{tpu_custom_call.1} parent=1 // pred_check_branch
      %244 = sbr.rel (0) target = $region41
    $region40: #{tpu_custom_call.1} parent=1 // pred_region
      %246 = dma.done [#allocation4], 128
    $region41: #{tpu_custom_call.1} parent=1 // pred_fallthru
      _
    %247 = vsyncpa [#allocation3], 1
    %248 = vsyncpa [#allocation6], 1
    %249 = vsyncpa [#allocation4], 1

</llo_original>
